<compile_context>
chip_gen: v7x
topology: tpu7x:2x2x1
jax: 0.10.0
libtpu: 0.0.40
codegen_flags: <defaults>
</compile_context>

<pallas_src>
import functools

import jax
import jax.numpy as jnp
from jax.experimental import pallas as pl
from jax.experimental.pallas import tpu as pltpu


def _round_up(x, m):
    return ((x + m - 1) // m) * m


def _nce_kernel(pred_ref, labels_ref, out_ref, acc_ref, *,
                n_real, tile_n, tiles_per_part, mask_rows):
    p = pl.program_id(0)          # partition (per-TensorCore on v7x)
    t = pl.program_id(1)          # batch tile within partition (reduction axis)

    @pl.when(t == 0)
    def _():
        acc_ref[...] = jnp.zeros_like(acc_ref)

    x = pred_ref[...].astype(jnp.float32)                     # (tile_n, C)
    labels = labels_ref[...]                                   # (tile_n, 1) int32
    col = jax.lax.broadcasted_iota(jnp.int32, x.shape, 1)

    m = jnp.max(x, axis=1, keepdims=True)                      # (tile_n, 1)
    e = jnp.exp(x - m)                                          # EUP
    lse = jnp.log(jnp.sum(e, axis=1, keepdims=True))
    mlse = m + lse                                              # logsumexp per row

    # x[i, labels[i]] without materializing a float one-hot (select, no mul).
    # Note: out-of-range labels (>= C) silently give xl = 0 (unlike torch one_hot).
    xl = jnp.sum(jnp.where(col == labels, x, 0.0), axis=1, keepdims=True)

    num = mlse - xl                                             # -logp[i, label_i]
    # Stable form of -sum_c logp[i, c] = sum_c (logsumexp - x_c); avoids the
    # catastrophic cancellation of C*(m+lse) - rowsum(x) for large |x| / C.
    den = jnp.sum(mlse - x, axis=1, keepdims=True)
    nce = num / den                                             # (tile_n, 1)

    if mask_rows:                                               # trailing partial block
        base = (p * tiles_per_part + t) * tile_n
        row = base + jax.lax.broadcasted_iota(jnp.int32, (tile_n, 1), 0)
        nce = jnp.where(row < n_real, nce, 0.0)                 # select: garbage-safe

    acc_ref[...] += nce

    @pl.when(t == pl.num_programs(1) - 1)
    def _():
        partial = jnp.sum(acc_ref[...])                         # one reduce / partition
        r = jax.lax.broadcasted_iota(jnp.int32, out_ref.shape, 0)
        c = jax.lax.broadcasted_iota(jnp.int32, out_ref.shape, 1)
        out_ref[...] = jnp.where((r == 0) & (c == 0), partial, 0.0)


def _default_num_parallel():
    # 2 TensorCores per chip only on v7x; v5e / v6e have 1 (the extra partition
    # would just be a serial loop with an extra epilogue reduce).
    try:
        kind = jax.devices()[0].device_kind.lower()
    except Exception:
        return 1
    return 2 if "v7" in kind else 1


def normalized_cross_entropy(pred, labels, num_classes, scale=1.0, *,
                             tile_n=None, num_parallel=None,
                             vmem_limit_bytes=None):
    """pred: (N, C) float (f32 or bf16), labels: (N,) int. Returns scalar f32."""
    n, c = pred.shape
    assert c == num_classes

    itemsize = jnp.dtype(pred.dtype).itemsize

    # Batch tile: ~4 MiB of pred per block (amortizes the ~0.35 us per-step
    # overhead, double-buffers comfortably on every generation).
    if tile_n is None:
        target_block_bytes = 4 * 1024 * 1024
        tile_n = max(8, (target_block_bytes // (c * itemsize)) // 8 * 8)
    tile_n = min(int(tile_n), _round_up(n, 8))
    tile_n = max(8, (tile_n // 8) * 8)

    n_blocks = -(-n // tile_n)
    if num_parallel is None:
        num_parallel = _default_num_parallel()
    p_count = max(1, min(int(num_parallel), n_blocks))
    tiles_per_part = -(-n_blocks // p_count)
    total_rows = p_count * tiles_per_part * tile_n
    mask_rows = total_rows != n
    last_block = n_blocks - 1

    if p_count * tiles_per_part == n_blocks:
        def idx_map(p, t):
            return (p * tiles_per_part + t, 0)
    else:
        # A trailing partition block may point past the last real block; clamp
        # the DMA to the last valid block (re-read, cheap) -- its logical rows
        # are >= n so the in-kernel row mask zeroes its contribution.
        def idx_map(p, t):
            return (jnp.minimum(p * tiles_per_part + t, last_block), 0)

    labels2d = labels.astype(jnp.int32).reshape(-1, 1)

    if vmem_limit_bytes is None:
        # 2 double-buffered pred blocks + a few full-tile f32 temporaries.
        block_bytes = tile_n * c * itemsize
        tile_f32_bytes = tile_n * c * 4
        vmem_limit_bytes = int(min(64 * 1024 * 1024,
                                   max(16 * 1024 * 1024,
                                       2 * block_bytes + 4 * tile_f32_bytes
                                       + (2 << 20))))

    kernel = functools.partial(_nce_kernel, n_real=n, tile_n=tile_n,
                               tiles_per_part=tiles_per_part,
                               mask_rows=mask_rows)

    cost = pl.CostEstimate(
        flops=8 * n * c,
        transcendentals=n * c,                                  # exp per element
        bytes_accessed=n * c * itemsize + n * 4 + p_count * 8 * 128 * 4,
    )

    partials = pl.pallas_call(
        kernel,
        out_shape=jax.ShapeDtypeStruct((p_count * 8, 128), jnp.float32),
        grid_spec=pltpu.PrefetchScalarGridSpec(
            num_scalar_prefetch=0,
            grid=(p_count, tiles_per_part),
            in_specs=[
                pl.BlockSpec((tile_n, c), idx_map),   # full-C block: no class pad
                pl.BlockSpec((tile_n, 1), idx_map),
            ],
            out_specs=pl.BlockSpec((8, 128), lambda p, t: (p, 0)),
            scratch_shapes=[pltpu.VMEM((tile_n, 1), jnp.float32)],
        ),
        compiler_params=pltpu.CompilerParams(
            dimension_semantics=("parallel", "arbitrary"),
            vmem_limit_bytes=vmem_limit_bytes,
        ),
        cost_estimate=cost,
    )(pred, labels2d)

    # Finish the batch mean (and scale) on the tiny (p_count*8, 128) partials.
    return (jnp.float32(scale) / jnp.float32(n)) * jnp.sum(partials)


def _reference(pred, labels, num_classes, scale=1.0):
    logp = jax.nn.log_softmax(pred.astype(jnp.float32), axis=1)
    onehot = jax.nn.one_hot(labels, num_classes, dtype=jnp.float32)
    nce = -jnp.sum(onehot * logp, axis=1) / (-jnp.sum(logp, axis=1))
    return scale * jnp.mean(nce)


if __name__ == "__main__":
    num_classes = 32
    batch = 16
    scale = 1.0

    key = jax.random.PRNGKey(0)
    k1, k2 = jax.random.split(key)
    pred = jax.random.normal(k1, (batch, num_classes), dtype=jnp.float32)
    labels = jax.random.randint(k2, (batch,), 0, num_classes, dtype=jnp.int32)

    out = normalized_cross_entropy(pred, labels, num_classes, scale)
    out = jax.block_until_ready(out)
    ref = _reference(pred, labels, num_classes, scale)
    assert jnp.allclose(out, ref, atol=1e-5, rtol=1e-5), (out, ref)

    # Uneven batch exercises the unpadded partial-block row-masking path.
    k3, k4 = jax.random.split(k2)
    pred2 = jax.random.normal(k3, (13, num_classes), dtype=jnp.float32)
    labels2 = jax.random.randint(k4, (13,), 0, num_classes, dtype=jnp.int32)
    out2 = jax.block_until_ready(
        normalized_cross_entropy(pred2, labels2, num_classes, 2.0))
    ref2 = _reference(pred2, labels2, num_classes, 2.0)
    assert jnp.allclose(out2, ref2, atol=1e-5, rtol=1e-5), (out2, ref2)

    print("KERNEL_OK")
</pallas_src>

<mosaic_0001>
module attributes {stable_mosaic.version = 11 : i64} {
  func.func @_nce_kernel(%arg0: i32, %arg1: i32, %arg2: memref<16x32xf32, #tpu.memory_space<vmem>>, %arg3: memref<16x1xi32, #tpu.memory_space<vmem>>, %arg4: memref<8x128xf32, #tpu.memory_space<vmem>>, %arg5: memref<16x1xf32, #tpu.memory_space<vmem>>) attributes {dimension_semantics = [#tpu.dimension_semantics<parallel>, #tpu.dimension_semantics<arbitrary>], iteration_bounds = array<i64: 1, 1>, scalar_prefetch = 0 : i64, scratch_operands = 1 : i64, tpu.core_type = #tpu.core_type<tc>, window_params = [{transform_indices = @transform_0, window_bounds = array<i64: 16, 32>}, {transform_indices = @transform_1, window_bounds = array<i64: 16, 1>}, {transform_indices = @transform_2, window_bounds = array<i64: 8, 128>}]} {
    %c0_i32 = arith.constant 0 : i32
    %0 = arith.cmpi eq, %arg1, %c0_i32 : i32
    %1 = arith.extui %0 : i1 to i32
    %c0_i32_0 = arith.constant 0 : i32
    %2 = arith.cmpi ne, %1, %c0_i32_0 : i32
    scf.if %2 {
      %cst_14 = arith.constant 0.000000e+00 : f32
      %33 = vector.broadcast %cst_14 : f32 to vector<16x1xf32>
      %c0_15 = arith.constant 0 : index
      %c0_16 = arith.constant 0 : index
      %34 = vector.load %arg5[%c0_15, %c0_16] : memref<16x1xf32, #tpu.memory_space<vmem>>, vector<16x1xf32>
      tpu.vector_store %arg5[%c0_15, %c0_16], %33 {strides = array<i32>} : memref<16x1xf32, #tpu.memory_space<vmem>>, vector<16x1xf32>,
    } else {
    }
    %c0 = arith.constant 0 : index
    %c0_1 = arith.constant 0 : index
    %3 = vector.load %arg2[%c0, %c0_1] : memref<16x32xf32, #tpu.memory_space<vmem>>, vector<16x32xf32>
    %c0_2 = arith.constant 0 : index
    %c0_3 = arith.constant 0 : index
    %4 = vector.load %arg3[%c0_2, %c0_3] : memref<16x1xi32, #tpu.memory_space<vmem>>, vector<16x1xi32>
    %5 = tpu.iota {dimensions = array<i32: 1>} : vector<16x32xi32>
    %cst = arith.constant dense<0xFF800000> : vector<16xf32>
    %6 = vector.multi_reduction <maximumf>, %3, %cst [1] : vector<16x32xf32> to vector<16xf32>
    %7 = vector.shape_cast %6 : vector<16xf32> to vector<16x1xf32>
    %8 = vector.broadcast %7 : vector<16x1xf32> to vector<16x32xf32>
    %9 = arith.subf %3, %8 : vector<16x32xf32>
    %10 = math.exp %9 : vector<16x32xf32>
    %cst_4 = arith.constant dense<0.000000e+00> : vector<16xf32>
    %11 = vector.multi_reduction <add>, %10, %cst_4 [1] : vector<16x32xf32> to vector<16xf32>
    %12 = vector.shape_cast %11 : vector<16xf32> to vector<16x1xf32>
    %13 = math.log %12 : vector<16x1xf32>
    %14 = arith.addf %7, %13 : vector<16x1xf32>
    %15 = vector.broadcast %4 : vector<16x1xi32> to vector<16x32xi32>
    %16 = arith.cmpi eq, %5, %15 : vector<16x32xi32>
    %cst_5 = arith.constant 0.000000e+00 : f32
    %17 = vector.broadcast %cst_5 : f32 to vector<16x32xf32>
    %18 = arith.select %16, %3, %17 : vector<16x32xi1>, vector<16x32xf32>
    %cst_6 = arith.constant dense<0.000000e+00> : vector<16xf32>
    %19 = vector.multi_reduction <add>, %18, %cst_6 [1] : vector<16x32xf32> to vector<16xf32>
    %20 = vector.shape_cast %19 : vector<16xf32> to vector<16x1xf32>
    %21 = arith.subf %14, %20 : vector<16x1xf32>
    %22 = vector.broadcast %14 : vector<16x1xf32> to vector<16x32xf32>
    %23 = arith.subf %22, %3 : vector<16x32xf32>
    %cst_7 = arith.constant dense<0.000000e+00> : vector<16xf32>
    %24 = vector.multi_reduction <add>, %23, %cst_7 [1] : vector<16x32xf32> to vector<16xf32>
    %25 = vector.shape_cast %24 : vector<16xf32> to vector<16x1xf32>
    %26 = arith.divf %21, %25 : vector<16x1xf32>
    %c0_8 = arith.constant 0 : index
    %c0_9 = arith.constant 0 : index
    %27 = vector.load %arg5[%c0_8, %c0_9] : memref<16x1xf32, #tpu.memory_space<vmem>>, vector<16x1xf32>
    %28 = arith.addf %27, %26 : vector<16x1xf32>
    %c0_10 = arith.constant 0 : index
    %c0_11 = arith.constant 0 : index
    %29 = vector.load %arg5[%c0_10, %c0_11] : memref<16x1xf32, #tpu.memory_space<vmem>>, vector<16x1xf32>
    tpu.vector_store %arg5[%c0_10, %c0_11], %28 {strides = array<i32>} : memref<16x1xf32, #tpu.memory_space<vmem>>, vector<16x1xf32>,
    %c0_i32_12 = arith.constant 0 : i32
    %30 = arith.cmpi eq, %arg1, %c0_i32_12 : i32
    %31 = arith.extui %30 : i1 to i32
    %c0_i32_13 = arith.constant 0 : i32
    %32 = arith.cmpi ne, %31, %c0_i32_13 : i32
    scf.if %32 {
      %c0_14 = arith.constant 0 : index
      %c0_15 = arith.constant 0 : index
      %33 = vector.load %arg5[%c0_14, %c0_15] : memref<16x1xf32, #tpu.memory_space<vmem>>, vector<16x1xf32>
      %34 = vector.shape_cast %33 : vector<16x1xf32> to vector<1x16x1xf32>
      %cst_16 = arith.constant dense<0.000000e+00> : vector<1xf32>
      %35 = vector.multi_reduction <add>, %34, %cst_16 [1, 2] : vector<1x16x1xf32> to vector<1xf32>
      %36 = vector.shape_cast %35 : vector<1xf32> to vector<1x1x1xf32>
      %37 = vector.extract %36[0, 0, 0] : f32 from vector<1x1x1xf32>
      %38 = tpu.iota {dimensions = array<i32: 0>} : vector<8x128xi32>
      %39 = tpu.iota {dimensions = array<i32: 1>} : vector<8x128xi32>
      %c0_i32_17 = arith.constant 0 : i32
      %40 = vector.broadcast %c0_i32_17 : i32 to vector<8x128xi32>
      %41 = arith.cmpi eq, %38, %40 : vector<8x128xi32>
      %c0_i32_18 = arith.constant 0 : i32
      %42 = vector.broadcast %c0_i32_18 : i32 to vector<8x128xi32>
      %43 = arith.cmpi eq, %39, %42 : vector<8x128xi32>
      %44 = arith.andi %41, %43 : vector<8x128xi1>
      %cst_19 = arith.constant 0.000000e+00 : f32
      %45 = vector.broadcast %37 : f32 to vector<8x128xf32>
      %46 = vector.broadcast %cst_19 : f32 to vector<8x128xf32>
      %47 = arith.select %44, %45, %46 : vector<8x128xi1>, vector<8x128xf32>
      %c0_20 = arith.constant 0 : index
      %c0_21 = arith.constant 0 : index
      %48 = vector.load %arg4[%c0_20, %c0_21] : memref<8x128xf32, #tpu.memory_space<vmem>>, vector<8x128xf32>
      tpu.vector_store %arg4[%c0_20, %c0_21], %47 {strides = array<i32>} : memref<8x128xf32, #tpu.memory_space<vmem>>, vector<8x128xf32>,
    } else {
    }
    return
  }
  func.func @transform_0(%arg0: i32, %arg1: i32) -> (i32, i32) {
    %c1_i32 = arith.constant 1 : i32
    %0 = arith.muli %arg0, %c1_i32 : i32
    %1 = arith.addi %0, %arg1 : i32
    %c0_i32 = arith.constant 0 : i32
    %c0_i32_0 = arith.constant 0 : i32
    return %1, %c0_i32 : i32, i32
  }
  func.func @transform_1(%arg0: i32, %arg1: i32) -> (i32, i32) {
    %c1_i32 = arith.constant 1 : i32
    %0 = arith.muli %arg0, %c1_i32 : i32
    %1 = arith.addi %0, %arg1 : i32
    %c0_i32 = arith.constant 0 : i32
    %c0_i32_0 = arith.constant 0 : i32
    return %1, %c0_i32 : i32, i32
  }
  func.func @transform_2(%arg0: i32, %arg1: i32) -> (i32, i32) {
    %c0_i32 = arith.constant 0 : i32
    %c0_i32_0 = arith.constant 0 : i32
    return %arg0, %c0_i32 : i32, i32
  }
}

</mosaic_0001>

<llo_original>
// kernel: tpu_custom_call.1
$region0: #{tpu_custom_call.1}
  #allocation0 [shape = 'u32[]', space=smem, size = 0x4, offset = 0x4, fixed_abs, tag = 'smem constant byte address 0x4 - core index']
  #allocation1 [shape = 'u32[144,128]{1,0:T(1,128)}', space=vmem, size = 0x12000, scoped, tag = 'internal scratch']
  #allocation2 [shape = 'f32[16,1]{1,0:T(8,128)}', space=vmem, size = 0x2000, scoped, tag = 'scratch operand']
  %s0 = inlined_call_operand.vmem [shape: f32[16,32], index: 0, kind: input, shape index: {}]
  %s1 = inlined_call_operand.vmem [shape: s32[16,1], index: 1, kind: input, shape index: {}]
  %s2 = inlined_call_operand.hbm [shape: f32[8,128], index: 2, kind: output, shape index: {}]
  %s3 = sld [smem:[#allocation0]]
  $region26: #{tpu_custom_call.1} parent=0
    _
  %s5 = ssub.s32 1, %s3
  %s6 = scalar_select 0, %s5, %s3
  $region1: #{tpu_custom_call.1} parent=0
    #allocation3 [shape = 'u8[4096]{0}', space=vmem, size = 0x1000, scoped, tag = 'output window, operand 0, single buffered']
    #allocation4 [shape = 's32[1]{0}', space=sflag, size = 0x4, scoped, tag = 'scoped memory for tpu_custom_call.1']
    %7 = vsyncpa [#allocation4], 0
    // Predicated region
    $region2: #{tpu_custom_call.1} parent=1 // pred_check
      _
    $region3: #{tpu_custom_call.1} parent=1 // pred_check_branch
      %9 = sbr.rel (0) target = $region5
    $region4: #{tpu_custom_call.1} parent=1 // pred_region
      %s10 = sadd.s32 0, 0
      %s11 = smul.u32 2, %s10
      %p12 = scmp.lt.s32.totalorder %s11, 1
      %s13 = scalar_select %p12, %s11, 1
      %s14 = smul.addr %s13, 8
      %s15 = scalar_lea.vmem %s0, %s14
      %s16 = sadd.s32 0, 0
      %s17 = smul.u32 2, %s16
    $region5: #{tpu_custom_call.1} parent=1 // pred_fallthru
      _
    // Predicated region
    $region6: #{tpu_custom_call.1} parent=1 // pred_check
      _
    $region7: #{tpu_custom_call.1} parent=1 // pred_check_branch
      %19 = sbr.rel (0) target = $region9
    $region8: #{tpu_custom_call.1} parent=1 // pred_region
      %s20 = sadd.s32 0, 0
      %s21 = smul.u32 2, %s20
      %p22 = scmp.lt.s32.totalorder %s21, 1
      %s23 = scalar_select %p22, %s21, 1
      %s24 = smul.addr %s23, 8
      %s25 = scalar_lea.vmem %s1, %s24
      %s26 = sadd.s32 0, 0
      %s27 = smul.u32 2, %s26
    $region9: #{tpu_custom_call.1} parent=1 // pred_fallthru
      _
    %s28 = sadd.s32 0, 0
    %s29 = smul.u32 2, %s28
    %p30 = scmp.lt.s32.totalorder %s29, 1
    %s31 = scalar_select %p30, %s29, 1
    %s32 = smul.addr %s31, 8
    %s33 = scalar_lea.vmem %s0, %s32
    %s34 = sadd.s32 0, 0
    %s35 = smul.u32 2, %s34
    %p36 = scmp.lt.s32.totalorder %s35, 1
    %s37 = scalar_select %p36, %s35, 1
    %s38 = smul.addr %s37, 8
    %s39 = scalar_lea.vmem %s1, %s38
    %s40 = sadd.s32 0, 0
    %s41 = smul.u32 2, %s40
    %p42 = scmp.lt.s32.totalorder %s41, 1
    %s43 = scalar_select %p42, %s41, 1
    %s44 = smul.addr %s43, 8
    %s45 = scalar_lea.vmem %s0, %s44
    %s46 = sadd.s32 0, 0
    %s47 = smul.u32 2, %s46
    %s48 = sadd.s32 0, 0
    %s49 = smul.u32 2, %s48
    %p50 = scmp.lt.s32.totalorder %s49, 1
    %s51 = scalar_select %p50, %s49, 1
    %s52 = smul.addr %s51, 8
    %s53 = scalar_lea.vmem %s1, %s52
    %s54 = sadd.s32 0, 0
    %s55 = smul.u32 2, %s54
    %p56 = scmp.eq.s32.totalorder 0, 0
    // Predicated region
    $region10: #{tpu_custom_call.1} parent=1 // pred_check
      %p57 = pneg %p56
    $region11: #{tpu_custom_call.1} parent=1 // pred_check_branch
      %59 = sbr.rel (%p57) target = $region13
    $region12: #{tpu_custom_call.1} parent=1 // pred_region
      %vm60 = vcmask 7168
      %61 = vst.msk [vmem:[#allocation2] sm:$0xff] %vm60, 0.0
      %62 = vst.msk [vmem:[#allocation2 + $0x8] sm:$0xff] %vm60, 0.0
    $region13: #{tpu_custom_call.1} parent=1 // pred_fallthru
      _
    %v63 = vld [vmem:[%s45] sm:$0xff]
    %v64 = vld [vmem:[%s45 + $0x8] sm:$0xff]
    %v65 = vld [vmem:[%s53] sm:$0xff]
    %v66 = vld [vmem:[%s53 + $0x8] sm:$0xff]
    %v67 = vlaneseq
    %v68 = vand.u32 %v67, 127
    %vm69 = vcmask 261120
    %v70 = vsel %vm69, %v63, -inf
    %71 = vmax.xlane.f32.xlu0 %v70
    %v72 = vpop.xlane.xlu0 %71
    %v73 = vsel %vm69, %v64, -inf
    %74 = vmax.xlane.f32.xlu0 %v73
    %v75 = vpop.xlane.xlu0 %74
    %v76 = vsub.f32 %v63, %v72
    %v77 = vsub.f32 %v64, %v75
    %v78 = vmul.f32 %v76, 1.442695
    %v79 = vpow.pop %v78
    %v80 = vmul.f32 %v77, 1.442695
    %v81 = vpow.pop %v80
    %v82 = vsel %vm69, %v79, 0.0
    %83 = vadd.xlane.f32.xlu0 %v82
    %v84 = vpop.xlane.xlu0 %83
    %v85 = vsel %vm69, %v81, 0.0
    %86 = vadd.xlane.f32.xlu0 %v85
    %v87 = vpop.xlane.xlu0 %86
    %v88 = vlog2.pop %v84
    %v89 = vmul.f32 %v88, 0.6931472
    %v90 = vlog2.pop %v87
    %v91 = vmul.f32 %v90, 0.6931472
    %v92 = vadd.f32 %v72, %v89
    %v93 = vadd.f32 %v75, %v91
    %94 = vset.pattern.permute.xlu0 0
    %95 = vperm.xlu0 %94, %v65
    %v96 = vpop.permute.xlu0 %95
    %97 = vset.pattern.permute.xlu0 0
    %98 = vperm.xlu0 %97, %v66
    %v99 = vpop.permute.xlu0 %98
    %vm100 = vcmp.eq.s32.totalorder %v68, %v96
    %vm101 = vcmp.eq.s32.totalorder %v68, %v99
    %v102 = vsel %vm100, %v63, 0.0
    %v103 = vsel %vm101, %v64, 0.0
    %v104 = vsel %vm69, %v102, 0.0
    %105 = vadd.xlane.f32.xlu0 %v104
    %v106 = vpop.xlane.xlu0 %105
    %v107 = vsel %vm69, %v103, 0.0
    %108 = vadd.xlane.f32.xlu0 %v107
    %v109 = vpop.xlane.xlu0 %108
    %v110 = vsub.f32 %v92, %v106
    %v111 = vsub.f32 %v93, %v109
    %v112 = vsub.f32 %v92, %v63
    %v113 = vsub.f32 %v93, %v64
    %v114 = vsel %vm69, %v112, 0.0
    %115 = vadd.xlane.f32.xlu0 %v114
    %v116 = vpop.xlane.xlu0 %115
    %v117 = vsel %vm69, %v113, 0.0
    %118 = vadd.xlane.f32.xlu0 %v117
    %v119 = vpop.xlane.xlu0 %118
    %v120 = vrcp.pop %v116
    %v121 = vmul.f32 %v110, %v120
    %v122 = vrcp.pop %v119
    %v123 = vmul.f32 %v111, %v122
    %v124 = vld [vmem:[#allocation2] sm:$0xff]
    %v125 = vld [vmem:[#allocation2 + $0x8] sm:$0xff]
    %v126 = vadd.f32 %v124, %v121
    %v127 = vadd.f32 %v125, %v123
    %vm128 = vcmask 7168
    %129 = vst.msk [vmem:[#allocation2] sm:$0xff] %vm128, %v126
    %130 = vst.msk [vmem:[#allocation2 + $0x8] sm:$0xff] %vm128, %v127
    // Predicated region
    $region14: #{tpu_custom_call.1} parent=1 // pred_check
      %p131 = pneg %p56
    $region15: #{tpu_custom_call.1} parent=1 // pred_check_branch
      %133 = sbr.rel (%p131) target = $region17
    $region16: #{tpu_custom_call.1} parent=1 // pred_region
      %v134 = vld [vmem:[#allocation2] sm:$0xff]
      %v135 = vld [vmem:[#allocation2 + $0x8] sm:$0xff]
      %v136 = vsel %vm128, %v134, 0.0
      %v137 = vsel %vm128, %v135, 0.0
      %v138 = vadd.f32 %v136, %v137
      %139 = vadd.xlane.f32.xlu0 %v138
      %v140 = vpop.xlane.xlu0 %139
      %v141 = vrot.slane %v140, 4
      %v142 = vadd.f32 %v140, %v141
      %v143 = vrot.slane %v142, 2
      %v144 = vadd.f32 %v142, %v143
      %v145 = vrot.slane %v144, 1
      %v146 = vadd.f32 %v144, %v145
      %s147 = vtos %v146
      %v148 = vlaneseq
      %v149 = vshrl.u32 %v148, 7
      %vm150 = vcmp.eq.s32.totalorder %v149, 0
      %vm151 = vcmp.eq.s32.totalorder %v68, 0
      %vm152 = vmand %vm150, %vm151
      %v153 = vstv %s147
      %v154 = vsel %vm152, %v153, 0.0
      %155 = vst [vmem:[#allocation3] sm:$0xff] %v154
    $region17: #{tpu_custom_call.1} parent=1 // pred_fallthru
      _
    // Predicated region
    $region18: #{tpu_custom_call.1} parent=1 // pred_check
      _
    $region19: #{tpu_custom_call.1} parent=1 // pred_check_branch
      %157 = sbr.rel (0) target = $region21
    $region20: #{tpu_custom_call.1} parent=1 // pred_region
      %s159 = ssub.s32 128, 128
      %160 = vsyncadd [#allocation4], %s159
      %s162 = sshll.u32 [#allocation3], 4
      %s163 = int_to_ptr.vmem [resolvable:$true] %s162
      %165 = dma.vmem_to_hbm [thread:$0]  %s163, 128, %s2, [#allocation4]
    $region21: #{tpu_custom_call.1} parent=1 // pred_fallthru
      _
    // Predicated region
    $region22: #{tpu_custom_call.1} parent=1 // pred_check
      _
    $region23: #{tpu_custom_call.1} parent=1 // pred_check_branch
      %167 = sbr.rel (0) target = $region25
    $region24: #{tpu_custom_call.1} parent=1 // pred_region
      %168 = dma.done [#allocation4], 128
    $region25: #{tpu_custom_call.1} parent=1 // pred_fallthru
      _
    %169 = vsyncpa [#allocation4], 1

</llo_original>
